<compile_context>
chip_gen: v6e
topology: v6e:2x2x1
jax: 0.10.0
libtpu: 0.0.40
codegen_flags: <defaults>
</compile_context>

<pallas_src>
import math
import functools

import jax
import jax.numpy as jnp
from jax import lax
from jax.experimental import pallas as pl
from jax.experimental.pallas import tpu as pltpu


def _arcface_kernel(label_ref, x_ref, w_ref, out_ref, *,
                    cos_m, sin_m, th, mm, s, easy_margin, tile_n):
    # label_ref: (B, 1) int32   x_ref: (B, D) pre-normalized
    # w_ref:     (tile_n, D)    out_ref: (B, tile_n) f32
    eps = 1e-12

    # Per-class-row L2 normalization of the streamed weight tile.
    # rsqrt lowers to the EUP (its own VLIW slot); the normalization then
    # costs a single VPU multiply over the (tile_n, D) tile.
    w = w_ref[...].astype(jnp.float32)
    w_sumsq = jnp.sum(w * w, axis=1, keepdims=True)
    w_norm = (w * lax.rsqrt(jnp.maximum(w_sumsq, eps * eps))).astype(w_ref.dtype)

    # cosine = x_norm @ w_norm^T, contraction over the feature dim of BOTH
    # operands -> no (tile_n, D) -> (D, tile_n) transpose pass on the XLU.
    cosine = lax.dot_general(
        x_ref[...], w_norm,
        dimension_numbers=(((1,), (1,)), ((), ())),
        preferred_element_type=jnp.float32)

    # Margin math. Clamp the radicand: rounding can make cosine^2 exceed 1.
    sine = jnp.sqrt(jnp.maximum(1.0 - cosine * cosine, 0.0))
    phi = cosine * cos_m - sine * sin_m
    if easy_margin:
        phi = jnp.where(cosine > 0, phi, cosine)
    else:
        phi = jnp.where(cosine - th > 0, phi, cosine - mm)

    # one_hot.scatter_(1, label, 1) + blend == select on global class index.
    col_base = pl.program_id(0) * tile_n
    cols = col_base + lax.broadcasted_iota(jnp.int32, cosine.shape, 1)
    labels = label_ref[...].astype(jnp.int32)            # (B, 1), broadcasts
    out_ref[...] = (jnp.where(cols == labels, phi, cosine) * s).astype(out_ref.dtype)


def arc_margin_product(x, label, weight, *, s=32.0, m=0.5, easy_margin=False,
                       tile_n=512, stream_dtype=None):
    """x: (B, D) float, label: (B,) int, weight: (C, D) float -> (B, C) f32.

    stream_dtype: optional dtype (e.g. jnp.bfloat16) used to stream the weight
    tiles and the normalized x through HBM/MXU; accumulation stays f32.
    """
    B, D = x.shape
    C, D_w = weight.shape
    assert D == D_w

    cos_m = math.cos(m)
    sin_m = math.sin(m)
    th = math.cos(math.pi - m)
    mm = math.sin(math.pi - m) * m

    # Hoist F.normalize(x, dim=1) out of the per-tile loop (x is identical
    # for every class tile). x / max(||x||, eps) == x * rsqrt(max(||x||^2, eps^2)).
    eps = 1e-12
    x32 = x.astype(jnp.float32)
    x_norm = x32 * lax.rsqrt(
        jnp.maximum(jnp.sum(x32 * x32, axis=1, keepdims=True), eps * eps))

    stream_dt = jnp.dtype(stream_dtype) if stream_dtype is not None else weight.dtype
    x_norm = x_norm.astype(stream_dt)
    weight = weight.astype(stream_dt)

    # Class-axis tiling: round tile_n to a lane multiple, don't over-tile tiny
    # heads, and pad C up to a tile multiple (padded rows are all-zero ->
    # normalized to 0 -> cosine 0; they are sliced off below).
    tile_n = int(pl.cdiv(max(tile_n, 128), 128) * 128)
    tile_n = min(tile_n, int(pl.cdiv(C, 128) * 128))
    c_pad = int(pl.cdiv(C, tile_n) * tile_n)
    if c_pad != C:
        weight = jnp.pad(weight, ((0, c_pad - C), (0, 0)))

    label2d = label.reshape(B, 1).astype(jnp.int32)

    # Explicit VMEM budget: double-buffered weight tile + output tile + the
    # resident x/label blocks + in-kernel f32 temporaries, with headroom.
    # Capped at 48 MiB so the same configuration also fits v7x (64 MiB VMEM);
    # raising the limit past the 16 MiB v5e default lets big tiles through.
    itemsize = jnp.dtype(stream_dt).itemsize
    est = (2 * tile_n * D * itemsize          # weight double-buffer
           + tile_n * D * 4                   # in-kernel f32 copy of the tile
           + 2 * B * tile_n * 4               # output double-buffer
           + 6 * B * tile_n * 4               # f32 temporaries (cosine/sine/phi/...)
           + 2 * B * D * itemsize             # resident normalized x
           + 64 * 1024)
    vmem_limit = int(min(max(2 * est, 16 * 2**20), 48 * 2**20))

    kernel = functools.partial(
        _arcface_kernel,
        cos_m=cos_m, sin_m=sin_m, th=th, mm=mm, s=s,
        easy_margin=easy_margin, tile_n=tile_n)

    out = pl.pallas_call(
        kernel,
        out_shape=jax.ShapeDtypeStruct((B, c_pad), jnp.float32),
        grid_spec=pltpu.PrefetchScalarGridSpec(
            num_scalar_prefetch=0,
            grid=(c_pad // tile_n,),
            in_specs=[
                pl.BlockSpec((B, 1), lambda j: (0, 0)),        # label (resident)
                pl.BlockSpec((B, D), lambda j: (0, 0)),        # x_norm (resident)
                pl.BlockSpec((tile_n, D), lambda j: (j, 0)),   # streaming weight tile
            ],
            out_specs=pl.BlockSpec((B, tile_n), lambda j: (0, j)),
        ),
        compiler_params=pltpu.CompilerParams(
            dimension_semantics=("parallel",),
            vmem_limit_bytes=vmem_limit),
    )(label2d, x_norm, weight)

    return out[:, :C] if c_pad != C else out


def _reference(x, label, weight, *, s=32.0, m=0.5, easy_margin=False):
    eps = 1e-12
    xn = x / jnp.maximum(jnp.linalg.norm(x, axis=1, keepdims=True), eps)
    wn = weight / jnp.maximum(jnp.linalg.norm(weight, axis=1, keepdims=True), eps)
    cosine = xn @ wn.T
    sine = jnp.sqrt(1.0 - cosine ** 2)
    phi = cosine * math.cos(m) - sine * math.sin(m)
    th = math.cos(math.pi - m)
    mm = math.sin(math.pi - m) * m
    if easy_margin:
        phi = jnp.where(cosine > 0, phi, cosine)
    else:
        phi = jnp.where(cosine - th > 0, phi, cosine - mm)
    one_hot = jax.nn.one_hot(label, weight.shape[0], dtype=cosine.dtype)
    return (one_hot * phi + (1.0 - one_hot) * cosine) * s


if __name__ == "__main__":
    B = 8
    in_feature = 128
    out_feature = 1000   # intentionally NOT a multiple of 128 -> padding path
    s_param = 32.0
    m_param = 0.5

    key = jax.random.PRNGKey(0)
    kx, kw, kl = jax.random.split(key, 3)

    x = jax.random.normal(kx, (B, in_feature), dtype=jnp.float32)

    # Deterministic xavier_uniform_-style init for weight (out_feature, in_feature)
    bound = math.sqrt(6.0 / (in_feature + out_feature))
    weight = jax.random.uniform(
        kw, (out_feature, in_feature), dtype=jnp.float32,
        minval=-bound, maxval=bound)

    label = jax.random.randint(kl, (B,), 0, out_feature, dtype=jnp.int32)

    # f32 path vs reference (both margin branches)
    out = jax.block_until_ready(
        arc_margin_product(x, label, weight, s=s_param, m=m_param,
                           easy_margin=False))
    ref = _reference(x, label, weight, s=s_param, m=m_param, easy_margin=False)
    assert out.shape == (B, out_feature)
    assert jnp.allclose(out, ref, atol=1e-3, rtol=1e-3), "mismatch vs reference"

    out_em = jax.block_until_ready(
        arc_margin_product(x, label, weight, s=s_param, m=m_param,
                           easy_margin=True))
    ref_em = _reference(x, label, weight, s=s_param, m=m_param, easy_margin=True)
    assert jnp.allclose(out_em, ref_em, atol=1e-3, rtol=1e-3), "easy_margin mismatch"

    # bf16 weight-streaming path (halves HBM traffic on the class axis).
    # Bit-exactness vs the f32 reference is not expected (the margin branch
    # can flip near the threshold), so only check shape/finiteness here.
    out_bf16 = jax.block_until_ready(
        arc_margin_product(x, label, weight, s=s_param, m=m_param,
                           easy_margin=False, stream_dtype=jnp.bfloat16))
    assert out_bf16.shape == (B, out_feature)
    assert bool(jnp.all(jnp.isfinite(out_bf16)))

    print("KERNEL_OK")
</pallas_src>

<mosaic_0001>
module attributes {stable_mosaic.version = 11 : i64} {
  func.func @_arcface_kernel(%arg0: i32, %arg1: memref<8x1xi32, #tpu.memory_space<vmem>>, %arg2: memref<8x128xf32, #tpu.memory_space<vmem>>, %arg3: memref<512x128xf32, #tpu.memory_space<vmem>>, %arg4: memref<8x512xf32, #tpu.memory_space<vmem>>) attributes {dimension_semantics = [#tpu.dimension_semantics<parallel>], iteration_bounds = array<i64: 2>, scalar_prefetch = 0 : i64, scratch_operands = 0 : i64, tpu.core_type = #tpu.core_type<tc>, window_params = [{pipeline_mode = #tpu.pipeline_mode<synchronous>, transform_indices = @transform_0, window_bounds = array<i64: 8, 1>}, {pipeline_mode = #tpu.pipeline_mode<synchronous>, transform_indices = @transform_1, window_bounds = array<i64: 8, 128>}, {transform_indices = @transform_2, window_bounds = array<i64: 512, 128>}, {transform_indices = @transform_3, window_bounds = array<i64: 8, 512>}]} {
    %c0 = arith.constant 0 : index
    %c0_0 = arith.constant 0 : index
    %0 = vector.load %arg3[%c0, %c0_0] : memref<512x128xf32, #tpu.memory_space<vmem>>, vector<512x128xf32>
    %1 = arith.mulf %0, %0 : vector<512x128xf32>
    %cst = arith.constant dense<0.000000e+00> : vector<512xf32>
    %2 = vector.multi_reduction <add>, %1, %cst [1] : vector<512x128xf32> to vector<512xf32>
    %3 = vector.shape_cast %2 : vector<512xf32> to vector<512x1xf32>
    %cst_1 = arith.constant 1.000000e-24 : f32
    %4 = vector.broadcast %cst_1 : f32 to vector<512x1xf32>
    %5 = arith.maximumf %3, %4 : vector<512x1xf32>
    %6 = math.rsqrt %5 : vector<512x1xf32>
    %7 = vector.broadcast %6 : vector<512x1xf32> to vector<512x128xf32>
    %8 = arith.mulf %0, %7 : vector<512x128xf32>
    %c0_2 = arith.constant 0 : index
    %c0_3 = arith.constant 0 : index
    %9 = vector.load %arg2[%c0_2, %c0_3] : memref<8x128xf32, #tpu.memory_space<vmem>>, vector<8x128xf32>
    %cst_4 = arith.constant dense<0.000000e+00> : vector<8x512xf32>
    %10 = tpu.matmul %9, %8, %cst_4 {dimension_numbers = #tpu.dot_dimension_numbers<[1], [1], [0], [0], [0, 0, 1, 0], [], []>} : vector<8x128xf32>, vector<512x128xf32>, vector<8x512xf32> -> vector<8x512xf32>
    %11 = arith.mulf %10, %10 : vector<8x512xf32>
    %cst_5 = arith.constant 1.000000e+00 : f32
    %12 = vector.broadcast %cst_5 : f32 to vector<8x512xf32>
    %13 = arith.subf %12, %11 : vector<8x512xf32>
    %cst_6 = arith.constant 0.000000e+00 : f32
    %14 = vector.broadcast %cst_6 : f32 to vector<8x512xf32>
    %15 = arith.maximumf %13, %14 : vector<8x512xf32>
    %16 = math.sqrt %15 : vector<8x512xf32>
    %cst_7 = arith.constant 0.87758255 : f32
    %17 = vector.broadcast %cst_7 : f32 to vector<8x512xf32>
    %18 = arith.mulf %10, %17 : vector<8x512xf32>
    %cst_8 = arith.constant 0.47942555 : f32
    %19 = vector.broadcast %cst_8 : f32 to vector<8x512xf32>
    %20 = arith.mulf %16, %19 : vector<8x512xf32>
    %21 = arith.subf %18, %20 : vector<8x512xf32>
    %cst_9 = arith.constant -0.87758255 : f32
    %22 = vector.broadcast %cst_9 : f32 to vector<8x512xf32>
    %23 = arith.subf %10, %22 : vector<8x512xf32>
    %cst_10 = arith.constant 0.000000e+00 : f32
    %24 = vector.broadcast %cst_10 : f32 to vector<8x512xf32>
    %25 = arith.cmpf ogt, %23, %24 : vector<8x512xf32>
    %cst_11 = arith.constant 0.239712775 : f32
    %26 = vector.broadcast %cst_11 : f32 to vector<8x512xf32>
    %27 = arith.subf %10, %26 : vector<8x512xf32>
    %28 = arith.select %25, %21, %27 : vector<8x512xi1>, vector<8x512xf32>
    %c512_i32 = arith.constant 512 : i32
    %29 = arith.muli %arg0, %c512_i32 : i32
    %30 = tpu.iota {dimensions = array<i32: 1>} : vector<8x512xi32>
    %31 = vector.broadcast %29 : i32 to vector<8x512xi32>
    %32 = arith.addi %31, %30 : vector<8x512xi32>
    %c0_12 = arith.constant 0 : index
    %c0_13 = arith.constant 0 : index
    %33 = vector.load %arg1[%c0_12, %c0_13] : memref<8x1xi32, #tpu.memory_space<vmem>>, vector<8x1xi32>
    %34 = vector.broadcast %33 : vector<8x1xi32> to vector<8x512xi32>
    %35 = arith.cmpi eq, %32, %34 : vector<8x512xi32>
    %36 = arith.select %35, %28, %10 : vector<8x512xi1>, vector<8x512xf32>
    %cst_14 = arith.constant 3.200000e+01 : f32
    %37 = vector.broadcast %cst_14 : f32 to vector<8x512xf32>
    %38 = arith.mulf %36, %37 : vector<8x512xf32>
    %c0_15 = arith.constant 0 : index
    %c0_16 = arith.constant 0 : index
    %39 = vector.load %arg4[%c0_15, %c0_16] : memref<8x512xf32, #tpu.memory_space<vmem>>, vector<8x512xf32>
    tpu.vector_store %arg4[%c0_15, %c0_16], %38 {strides = array<i32>} : memref<8x512xf32, #tpu.memory_space<vmem>>, vector<8x512xf32>,
    return
  }
  func.func @transform_0(%arg0: i32) -> (i32, i32) {
    %c0_i32 = arith.constant 0 : i32
    %c0_i32_0 = arith.constant 0 : i32
    %c0_i32_1 = arith.constant 0 : i32
    return %c0_i32, %c0_i32_0 : i32, i32
  }
  func.func @transform_1(%arg0: i32) -> (i32, i32) {
    %c0_i32 = arith.constant 0 : i32
    %c0_i32_0 = arith.constant 0 : i32
    %c0_i32_1 = arith.constant 0 : i32
    return %c0_i32, %c0_i32_0 : i32, i32
  }
  func.func @transform_2(%arg0: i32) -> (i32, i32) {
    %c0_i32 = arith.constant 0 : i32
    %c0_i32_0 = arith.constant 0 : i32
    return %arg0, %c0_i32 : i32, i32
  }
  func.func @transform_3(%arg0: i32) -> (i32, i32) {
    %c0_i32 = arith.constant 0 : i32
    %c0_i32_0 = arith.constant 0 : i32
    return %c0_i32, %arg0 : i32, i32
  }
}

</mosaic_0001>

<llo_original>
// kernel: tpu_custom_call.1
$region0: #{tpu_custom_call.1}
  #allocation0 [shape = 'u32[]', space=smem, size = 0x4, offset = 0x4, fixed_abs, tag = 'smem constant byte address 0x4 - core index']
  #allocation1 [shape = 'u32[144,128]{1,0:T(1,128)}', space=vmem, size = 0x12000, scoped, tag = 'internal scratch']
  %s0 = inlined_call_operand.vmem [shape: s32[8,1], index: 0, kind: input, shape index: {}]
  %s1 = inlined_call_operand.vmem [shape: f32[8,128], index: 1, kind: input, shape index: {}]
  %s2 = inlined_call_operand.hbm [shape: f32[1024,128], index: 2, kind: input, shape index: {}]
  %s3 = inlined_call_operand.hbm [shape: f32[8,1024], index: 3, kind: output, shape index: {}]
  %s4 = sld [smem:[#allocation0]]
  $region49: #{tpu_custom_call.1} parent=0
    _
  %s6 = ssub.s32 1, %s4
  %s7 = scalar_select 0, %s6, %s4
  $region1: #{tpu_custom_call.1} parent=0
    #allocation2 [shape = 'u8[524288]{0}', space=vmem, size = 0x80000, scoped, tag = 'input window, operand 2']
    #allocation3 [shape = 's32[2]{0}', space=sflag, size = 0x8, scoped, tag = 'scoped memory for tpu_custom_call.1']
    #allocation4 [shape = 's32[2]{0}', space=sflag, size = 0x8, scoped, tag = 'scoped memory for tpu_custom_call.1']
    #allocation5 [shape = 'u8[32768]{0}', space=vmem, size = 0x8000, scoped, tag = 'output window, operand 0']
    %8 = vsyncpa [#allocation3], 0
    %s9 = scalar_lea.sflag [#allocation3], 1
    %10 = vsyncpa %s9, 0
    %11 = vsyncpa [#allocation4], 0
    %s12 = scalar_lea.sflag [#allocation4], 1
    %13 = vsyncpa %s12, 0
    loop: start=0, step=1, limit=4
    $region2: #{tpu_custom_call.1} parent=1 // loop_pre_header
      _
    $region3: #{tpu_custom_call.1} parent=1 // loop_header
      %s15 = sphi 0, %s19
      %p16 = scmp.ge.s32.totalorder %s15, 4
      %s23 = sphi 0, %s23
      %s25 = sphi 0, %s23
      %s26 = sphi 0, %s25
      %s40 = sphi 0, %s26
      %s44 = sphi 0, %s44
      %s46 = sphi 0, %s44
      %s47 = sphi 0, %s46
      %s61 = sphi 0, %s47
      %s67 = sphi 0, %s69
      %s70 = sphi 0, %s67
      %s71 = sphi 0, %s70
      %s87 = sphi 0, %s71
      %s93 = sphi 0, %s95
      %s96 = sphi 0, %s93
      %s97 = sphi 0, %s96
      %s113 = sphi 0, %s97
    $region4: #{tpu_custom_call.1} parent=1 // loop_header_branch
      %18 = sbr.rel (%p16) target = $region8
    $region5: #{tpu_custom_call.1} parent=1 // loop_body
      %s20 = ssub.s32 %s15, 1
      %s21 = ssub.s32 %s15, 2
      %s22 = sadd.s32 %s15, 1
      %s24 = sadd.s32 %s23, 1
      %p27 = scmp.eq.s32.totalorder %s15, 1
      %p28 = scmp.ne.s32.totalorder %s23, %s25
      %p29 = scmp.eq.s32.totalorder %s15, 0
      %p30 = por %p28, %p29
      %p31 = scmp.ne.s32.totalorder %s23, %s25
      %p32 = scmp.eq.s32.totalorder %s20, 1
      %p33 = por %p31, %p32
      %p34 = scmp.ne.s32.totalorder %s25, %s26
      %p35 = scmp.eq.s32.totalorder %s20, 0
      %p36 = por %p34, %p35
      %p37 = scmp.ne.s32.totalorder %s25, %s26
      %p38 = scmp.eq.s32.totalorder %s21, 1
      %p39 = por %p37, %p38
      %p41 = scmp.ne.s32.totalorder %s26, %s40
      %p42 = scmp.eq.s32.totalorder %s21, 0
      %p43 = por %p41, %p42
      %s45 = sadd.s32 %s44, 1
      %p48 = scmp.eq.s32.totalorder %s15, 1
      %p49 = scmp.ne.s32.totalorder %s44, %s46
      %p50 = scmp.eq.s32.totalorder %s15, 0
      %p51 = por %p49, %p50
      %p52 = scmp.ne.s32.totalorder %s44, %s46
      %p53 = scmp.eq.s32.totalorder %s20, 1
      %p54 = por %p52, %p53
      %p55 = scmp.ne.s32.totalorder %s46, %s47
      %p56 = scmp.eq.s32.totalorder %s20, 0
      %p57 = por %p55, %p56
      %p58 = scmp.ne.s32.totalorder %s46, %s47
      %p59 = scmp.eq.s32.totalorder %s21, 1
      %p60 = por %p58, %p59
      %p62 = scmp.ne.s32.totalorder %s47, %s61
      %p63 = scmp.eq.s32.totalorder %s21, 0
      %p64 = por %p62, %p63
      %s65 = ssub.s32 %s15, %s22
      %p66 = scmp.eq.s32.totalorder %s65, 0
      %s68 = sadd.s32 %s67, 1
      %s69 = scalar_select %p66, %s67, %s68
      %p72 = pneg %p66
      %p73 = scmp.eq.s32.totalorder %s15, 1
      %p74 = por %p72, %p73
      %p75 = scmp.ne.s32.totalorder %s67, %s70
      %p76 = scmp.eq.s32.totalorder %s15, 0
      %p77 = por %p75, %p76
      %p78 = scmp.ne.s32.totalorder %s67, %s70
      %p79 = scmp.eq.s32.totalorder %s20, 1
      %p80 = por %p78, %p79
      %p81 = scmp.ne.s32.totalorder %s70, %s71
      %p82 = scmp.eq.s32.totalorder %s20, 0
      %p83 = por %p81, %p82
      %p84 = scmp.ne.s32.totalorder %s70, %s71
      %p85 = scmp.eq.s32.totalorder %s21, 1
      %p86 = por %p84, %p85
      %p88 = scmp.ne.s32.totalorder %s71, %s87
      %p89 = scmp.eq.s32.totalorder %s21, 0
      %p90 = por %p88, %p89
      %s91 = ssub.s32 %s15, %s22
      %p92 = scmp.eq.s32.totalorder %s91, 0
      %s94 = sadd.s32 %s93, 1
      %s95 = scalar_select %p92, %s93, %s94
      %p98 = pneg %p92
      %p99 = scmp.eq.s32.totalorder %s15, 1
      %p100 = por %p98, %p99
      %p101 = scmp.ne.s32.totalorder %s93, %s96
      %p102 = scmp.eq.s32.totalorder %s15, 0
      %p103 = por %p101, %p102
      %p104 = scmp.ne.s32.totalorder %s93, %s96
      %p105 = scmp.eq.s32.totalorder %s20, 1
      %p106 = por %p104, %p105
      %p107 = scmp.ne.s32.totalorder %s96, %s97
      %p108 = scmp.eq.s32.totalorder %s20, 0
      %p109 = por %p107, %p108
      %p110 = scmp.ne.s32.totalorder %s96, %s97
      %p111 = scmp.eq.s32.totalorder %s21, 1
      %p112 = por %p110, %p111
      %p114 = scmp.ne.s32.totalorder %s97, %s113
      %p115 = scmp.eq.s32.totalorder %s21, 0
      %p116 = por %p114, %p115
      %p117 = scmp.le.s32.totalorder 1, %s15
      %p118 = scmp.lt.s32.totalorder %s15, 3
      %p119 = pnand %p117, %p118
      %p120 = pneg %p119
      // Predicated region
      $region9: #{tpu_custom_call.1} parent=5 // pred_check
        _
      $region10: #{tpu_custom_call.1} parent=5 // pred_check_branch
        %122 = sbr.rel (%p119) target = $region12
      $region11: #{tpu_custom_call.1} parent=5 // pred_region
        %s123 = ssub.s32 %s15, 1
        // Predicated region
        $region13: #{tpu_custom_call.1} parent=11 // pred_check
          %p124 = pneg %p36
        $region14: #{tpu_custom_call.1} parent=11 // pred_check_branch
          %126 = sbr.rel (%p124) target = $region16
        $region15: #{tpu_custom_call.1} parent=11 // pred_region
          _
        $region16: #{tpu_custom_call.1} parent=11 // pred_fallthru
          _
        // Predicated region
        $region17: #{tpu_custom_call.1} parent=11 // pred_check
          %p127 = pneg %p57
        $region18: #{tpu_custom_call.1} parent=11 // pred_check_branch
          %129 = sbr.rel (%p127) target = $region20
        $region19: #{tpu_custom_call.1} parent=11 // pred_region
          _
        $region20: #{tpu_custom_call.1} parent=11 // pred_fallthru
          _
      $region12: #{tpu_custom_call.1} parent=5 // pred_fallthru
        _
      %p130 = scmp.lt.s32.totalorder %s15, 2
      // Predicated region
      $region21: #{tpu_custom_call.1} parent=5 // pred_check
        %p131 = pneg %p130
      $region22: #{tpu_custom_call.1} parent=5 // pred_check_branch
        %133 = sbr.rel (%p131) target = $region24
      $region23: #{tpu_custom_call.1} parent=5 // pred_region
        // Predicated region
        $region25: #{tpu_custom_call.1} parent=23 // pred_check
          %p134 = pneg %p77
        $region26: #{tpu_custom_call.1} parent=23 // pred_check_branch
          %136 = sbr.rel (%p134) target = $region28
        $region27: #{tpu_custom_call.1} parent=23 // pred_region
          %s137 = sand.u32 %s67, 1
          %s138 = scalar_lea.sflag [#allocation3], %s137
          %s139 = sand.u32 %s67, 1
          %s140 = smul.addr %s139, 512
          %s141 = scalar_lea.vmem [#allocation2], %s140
          %s142 = smul.u32 64, %s15
          %s144 = ssub.s32 8192, 8192
          %145 = vsyncadd %s138, %s144
          %s146 = smul.addr %s142, 128
          %s147 = scalar_lea.hbm %s2, %s146
          %s148 = sshll.u32 %s141, 4
          %s149 = int_to_ptr.vmem [resolvable:$true] %s148
          %154 = dma.hbm_to_vmem [thread:$0]  %s147, 8192, %s149, %s138, 128, 128, 8
        $region28: #{tpu_custom_call.1} parent=23 // pred_fallthru
          _
      $region24: #{tpu_custom_call.1} parent=5 // pred_fallthru
        _
      %p155 = scmp.le.s32.totalorder 1, %s15
      %p156 = scmp.lt.s32.totalorder %s15, 3
      %p157 = pnand %p155, %p156
      %p158 = pneg %p157
      // Predicated region
      $region29: #{tpu_custom_call.1} parent=5 // pred_check
        _
      $region30: #{tpu_custom_call.1} parent=5 // pred_check_branch
        %160 = sbr.rel (%p157) target = $region32
      $region31: #{tpu_custom_call.1} parent=5 // pred_region
        %s161 = ssub.s32 %s15, 1
        %s162 = sand.u32 %s70, 1
        %s163 = scalar_lea.sflag [#allocation3], %s162
        %s164 = sand.u32 %s70, 1
        %s165 = smul.addr %s164, 512
        %s166 = scalar_lea.vmem [#allocation2], %s165
        // Predicated region
        $region33: #{tpu_custom_call.1} parent=31 // pred_check
          %p167 = pneg %p83
        $region34: #{tpu_custom_call.1} parent=31 // pred_check_branch
          %169 = sbr.rel (%p167) target = $region36
        $region35: #{tpu_custom_call.1} parent=31 // pred_region
          %170 = dma.done %s163, 8192
        $region36: #{tpu_custom_call.1} parent=31 // pred_fallthru
          _
        %p171 = pneg %p36
        %p172 = pneg %p33
        %p173 = pneg %p57
        %p174 = pneg %p54
        %s175 = sand.u32 %s70, 1
        %s176 = scalar_lea.sflag [#allocation3], %s175
        %s177 = sand.u32 %s70, 1
        %s178 = smul.addr %s177, 512
        %s179 = scalar_lea.vmem [#allocation2], %s178
        %p180 = pneg %p83
        %p181 = pneg %p80
        %p182 = pneg %p109
        %p183 = pneg %p106
        %s184 = sand.u32 %s96, 1
        %s185 = scalar_lea.sflag [#allocation4], %s184
        %s186 = sand.u32 %s96, 1
        %s187 = smul.addr %s186, 32
        %s188 = scalar_lea.vmem [#allocation5], %s187
        %s189 = smul.u32 64, %s20
        %s190 = smul.u32 4, %s20
        %v191 = vld [vmem:[%s166] sm:$0xff]
        %v192 = vld [vmem:[%s166 + $0x8] sm:$0xff]
        %v193 = vld [vmem:[%s166 + $0x10] sm:$0xff]
        %v194 = vld [vmem:[%s166 + $0x18] sm:$0xff]
        %v195 = vld [vmem:[%s166 + $0x20] sm:$0xff]
        %v196 = vld [vmem:[%s166 + $0x28] sm:$0xff]
        %v197 = vld [vmem:[%s166 + $0x30] sm:$0xff]
        %v198 = vld [vmem:[%s166 + $0x38] sm:$0xff]
        %v199 = vld [vmem:[%s166 + $0x40] sm:$0xff]
        %v200 = vld [vmem:[%s166 + $0x48] sm:$0xff]
        %v201 = vld [vmem:[%s166 + $0x50] sm:$0xff]
        %v202 = vld [vmem:[%s166 + $0x58] sm:$0xff]
        %v203 = vld [vmem:[%s166 + $0x60] sm:$0xff]
        %v204 = vld [vmem:[%s166 + $0x68] sm:$0xff]
        %v205 = vld [vmem:[%s166 + $0x70] sm:$0xff]
        %v206 = vld [vmem:[%s166 + $0x78] sm:$0xff]
        %v207 = vld [vmem:[%s166 + $0x80] sm:$0xff]
        %v208 = vld [vmem:[%s166 + $0x88] sm:$0xff]
        %v209 = vld [vmem:[%s166 + $0x90] sm:$0xff]
        %v210 = vld [vmem:[%s166 + $0x98] sm:$0xff]
        %v211 = vld [vmem:[%s166 + $0xa0] sm:$0xff]
        %v212 = vld [vmem:[%s166 + $0xa8] sm:$0xff]
        %v213 = vld [vmem:[%s166 + $0xb0] sm:$0xff]
        %v214 = vld [vmem:[%s166 + $0xb8] sm:$0xff]
        %v215 = vld [vmem:[%s166 + $0xc0] sm:$0xff]
        %v216 = vld [vmem:[%s166 + $0xc8] sm:$0xff]
        %v217 = vld [vmem:[%s166 + $0xd0] sm:$0xff]
        %v218 = vld [vmem:[%s166 + $0xd8] sm:$0xff]
        %v219 = vld [vmem:[%s166 + $0xe0] sm:$0xff]
        %v220 = vld [vmem:[%s166 + $0xe8] sm:$0xff]
        %v221 = vld [vmem:[%s166 + $0xf0] sm:$0xff]
        %v222 = vld [vmem:[%s166 + $0xf8] sm:$0xff]
        %v223 = vld [vmem:[%s166 + $0x100] sm:$0xff]
        %v224 = vld [vmem:[%s166 + $0x108] sm:$0xff]
        %v225 = vld [vmem:[%s166 + $0x110] sm:$0xff]
        %v226 = vld [vmem:[%s166 + $0x118] sm:$0xff]
        %v227 = vld [vmem:[%s166 + $0x120] sm:$0xff]
        %v228 = vld [vmem:[%s166 + $0x128] sm:$0xff]
        %v229 = vld [vmem:[%s166 + $0x130] sm:$0xff]
        %v230 = vld [vmem:[%s166 + $0x138] sm:$0xff]
        %v231 = vld [vmem:[%s166 + $0x140] sm:$0xff]
        %v232 = vld [vmem:[%s166 + $0x148] sm:$0xff]
        %v233 = vld [vmem:[%s166 + $0x150] sm:$0xff]
        %v234 = vld [vmem:[%s166 + $0x158] sm:$0xff]
        %v235 = vld [vmem:[%s166 + $0x160] sm:$0xff]
        %v236 = vld [vmem:[%s166 + $0x168] sm:$0xff]
        %v237 = vld [vmem:[%s166 + $0x170] sm:$0xff]
        %v238 = vld [vmem:[%s166 + $0x178] sm:$0xff]
        %v239 = vld [vmem:[%s166 + $0x180] sm:$0xff]
        %v240 = vld [vmem:[%s166 + $0x188] sm:$0xff]
        %v241 = vld [vmem:[%s166 + $0x190] sm:$0xff]
        %v242 = vld [vmem:[%s166 + $0x198] sm:$0xff]
        %v243 = vld [vmem:[%s166 + $0x1a0] sm:$0xff]
        %v244 = vld [vmem:[%s166 + $0x1a8] sm:$0xff]
        %v245 = vld [vmem:[%s166 + $0x1b0] sm:$0xff]
        %v246 = vld [vmem:[%s166 + $0x1b8] sm:$0xff]
        %v247 = vld [vmem:[%s166 + $0x1c0] sm:$0xff]
        %v248 = vld [vmem:[%s166 + $0x1c8] sm:$0xff]
        %v249 = vld [vmem:[%s166 + $0x1d0] sm:$0xff]
        %v250 = vld [vmem:[%s166 + $0x1d8] sm:$0xff]
        %v251 = vld [vmem:[%s166 + $0x1e0] sm:$0xff]
        %v252 = vld [vmem:[%s166 + $0x1e8] sm:$0xff]
        %v253 = vld [vmem:[%s166 + $0x1f0] sm:$0xff]
        %v254 = vld [vmem:[%s166 + $0x1f8] sm:$0xff]
        %v255 = vmul.f32 %v191, %v191
        %v256 = vmul.f32 %v192, %v192
        %v257 = vmul.f32 %v193, %v193
        %v258 = vmul.f32 %v194, %v194
        %v259 = vmul.f32 %v195, %v195
        %v260 = vmul.f32 %v196, %v196
        %v261 = vmul.f32 %v197, %v197
        %v262 = vmul.f32 %v198, %v198
        %v263 = vmul.f32 %v199, %v199
        %v264 = vmul.f32 %v200, %v200
        %v265 = vmul.f32 %v201, %v201
        %v266 = vmul.f32 %v202, %v202
        %v267 = vmul.f32 %v203, %v203
        %v268 = vmul.f32 %v204, %v204
        %v269 = vmul.f32 %v205, %v205
        %v270 = vmul.f32 %v206, %v206
        %v271 = vmul.f32 %v207, %v207
        %v272 = vmul.f32 %v208, %v208
        %v273 = vmul.f32 %v209, %v209
        %v274 = vmul.f32 %v210, %v210
        %v275 = vmul.f32 %v211, %v211
        %v276 = vmul.f32 %v212, %v212
        %v277 = vmul.f32 %v213, %v213
        %v278 = vmul.f32 %v214, %v214
        %v279 = vmul.f32 %v215, %v215
        %v280 = vmul.f32 %v216, %v216
        %v281 = vmul.f32 %v217, %v217
        %v282 = vmul.f32 %v218, %v218
        %v283 = vmul.f32 %v219, %v219
        %v284 = vmul.f32 %v220, %v220
        %v285 = vmul.f32 %v221, %v221
        %v286 = vmul.f32 %v222, %v222
        %v287 = vmul.f32 %v223, %v223
        %v288 = vmul.f32 %v224, %v224
        %v289 = vmul.f32 %v225, %v225
        %v290 = vmul.f32 %v226, %v226
        %v291 = vmul.f32 %v227, %v227
        %v292 = vmul.f32 %v228, %v228
        %v293 = vmul.f32 %v229, %v229
        %v294 = vmul.f32 %v230, %v230
        %v295 = vmul.f32 %v231, %v231
        %v296 = vmul.f32 %v232, %v232
        %v297 = vmul.f32 %v233, %v233
        %v298 = vmul.f32 %v234, %v234
        %v299 = vmul.f32 %v235, %v235
        %v300 = vmul.f32 %v236, %v236
        %v301 = vmul.f32 %v237, %v237
        %v302 = vmul.f32 %v238, %v238
        %v303 = vmul.f32 %v239, %v239
        %v304 = vmul.f32 %v240, %v240
        %v305 = vmul.f32 %v241, %v241
        %v306 = vmul.f32 %v242, %v242
        %v307 = vmul.f32 %v243, %v243
        %v308 = vmul.f32 %v244, %v244
        %v309 = vmul.f32 %v245, %v245
        %v310 = vmul.f32 %v246, %v246
        %v311 = vmul.f32 %v247, %v247
        %v312 = vmul.f32 %v248, %v248
        %v313 = vmul.f32 %v249, %v249
        %v314 = vmul.f32 %v250, %v250
        %v315 = vmul.f32 %v251, %v251
        %v316 = vmul.f32 %v252, %v252
        %v317 = vmul.f32 %v253, %v253
        %v318 = vmul.f32 %v254, %v254
        %319 = vadd.xlane.f32.xlu0 %v255
        %v320 = vpop.xlane.xlu0 %319
        %321 = vadd.xlane.f32.xlu0 %v256
        %v322 = vpop.xlane.xlu0 %321
        %323 = vadd.xlane.f32.xlu0 %v257
        %v324 = vpop.xlane.xlu0 %323
        %325 = vadd.xlane.f32.xlu0 %v258
        %v326 = vpop.xlane.xlu0 %325
        %327 = vadd.xlane.f32.xlu0 %v259
        %v328 = vpop.xlane.xlu0 %327
        %329 = vadd.xlane.f32.xlu0 %v260
        %v330 = vpop.xlane.xlu0 %329
        %331 = vadd.xlane.f32.xlu0 %v261
        %v332 = vpop.xlane.xlu0 %331
        %333 = vadd.xlane.f32.xlu0 %v262
        %v334 = vpop.xlane.xlu0 %333
        %335 = vadd.xlane.f32.xlu0 %v263
        %v336 = vpop.xlane.xlu0 %335
        %337 = vadd.xlane.f32.xlu0 %v264
        %v338 = vpop.xlane.xlu0 %337
        %339 = vadd.xlane.f32.xlu0 %v265
        %v340 = vpop.xlane.xlu0 %339
        %341 = vadd.xlane.f32.xlu0 %v266
        %v342 = vpop.xlane.xlu0 %341
        %343 = vadd.xlane.f32.xlu0 %v267
        %v344 = vpop.xlane.xlu0 %343
        %345 = vadd.xlane.f32.xlu0 %v268
        %v346 = vpop.xlane.xlu0 %345
        %347 = vadd.xlane.f32.xlu0 %v269
        %v348 = vpop.xlane.xlu0 %347
        %349 = vadd.xlane.f32.xlu0 %v270
        %v350 = vpop.xlane.xlu0 %349
        %351 = vadd.xlane.f32.xlu0 %v271
        %v352 = vpop.xlane.xlu0 %351
        %353 = vadd.xlane.f32.xlu0 %v272
        %v354 = vpop.xlane.xlu0 %353
        %355 = vadd.xlane.f32.xlu0 %v273
        %v356 = vpop.xlane.xlu0 %355
        %357 = vadd.xlane.f32.xlu0 %v274
        %v358 = vpop.xlane.xlu0 %357
        %359 = vadd.xlane.f32.xlu0 %v275
        %v360 = vpop.xlane.xlu0 %359
        %361 = vadd.xlane.f32.xlu0 %v276
        %v362 = vpop.xlane.xlu0 %361
        %363 = vadd.xlane.f32.xlu0 %v277
        %v364 = vpop.xlane.xlu0 %363
        %365 = vadd.xlane.f32.xlu0 %v278
        %v366 = vpop.xlane.xlu0 %365
        %367 = vadd.xlane.f32.xlu0 %v279
        %v368 = vpop.xlane.xlu0 %367
        %369 = vadd.xlane.f32.xlu0 %v280
        %v370 = vpop.xlane.xlu0 %369
        %371 = vadd.xlane.f32.xlu0 %v281
        %v372 = vpop.xlane.xlu0 %371
        %373 = vadd.xlane.f32.xlu0 %v282
        %v374 = vpop.xlane.xlu0 %373
        %375 = vadd.xlane.f32.xlu0 %v283
        %v376 = vpop.xlane.xlu0 %375
        %377 = vadd.xlane.f32.xlu0 %v284
        %v378 = vpop.xlane.xlu0 %377
        %379 = vadd.xlane.f32.xlu0 %v285
        %v380 = vpop.xlane.xlu0 %379
        %381 = vadd.xlane.f32.xlu0 %v286
        %v382 = vpop.xlane.xlu0 %381
        %383 = vadd.xlane.f32.xlu0 %v287
        %v384 = vpop.xlane.xlu0 %383
        %385 = vadd.xlane.f32.xlu0 %v288
        %v386 = vpop.xlane.xlu0 %385
        %387 = vadd.xlane.f32.xlu0 %v289
        %v388 = vpop.xlane.xlu0 %387
        %389 = vadd.xlane.f32.xlu0 %v290
        %v390 = vpop.xlane.xlu0 %389
        %391 = vadd.xlane.f32.xlu0 %v291
        %v392 = vpop.xlane.xlu0 %391
        %393 = vadd.xlane.f32.xlu0 %v292
        %v394 = vpop.xlane.xlu0 %393
        %395 = vadd.xlane.f32.xlu0 %v293
        %v396 = vpop.xlane.xlu0 %395
        %397 = vadd.xlane.f32.xlu0 %v294
        %v398 = vpop.xlane.xlu0 %397
        %399 = vadd.xlane.f32.xlu0 %v295
        %v400 = vpop.xlane.xlu0 %399
        %401 = vadd.xlane.f32.xlu0 %v296
        %v402 = vpop.xlane.xlu0 %401
        %403 = vadd.xlane.f32.xlu0 %v297
        %v404 = vpop.xlane.xlu0 %403
        %405 = vadd.xlane.f32.xlu0 %v298
        %v406 = vpop.xlane.xlu0 %405
        %407 = vadd.xlane.f32.xlu0 %v299
        %v408 = vpop.xlane.xlu0 %407
        %409 = vadd.xlane.f32.xlu0 %v300
        %v410 = vpop.xlane.xlu0 %409
        %411 = vadd.xlane.f32.xlu0 %v301
        %v412 = vpop.xlane.xlu0 %411
        %413 = vadd.xlane.f32.xlu0 %v302
        %v414 = vpop.xlane.xlu0 %413
        %415 = vadd.xlane.f32.xlu0 %v303
        %v416 = vpop.xlane.xlu0 %415
        %417 = vadd.xlane.f32.xlu0 %v304
        %v418 = vpop.xlane.xlu0 %417
        %419 = vadd.xlane.f32.xlu0 %v305
        %v420 = vpop.xlane.xlu0 %419
        %421 = vadd.xlane.f32.xlu0 %v306
        %v422 = vpop.xlane.xlu0 %421
        %423 = vadd.xlane.f32.xlu0 %v307
        %v424 = vpop.xlane.xlu0 %423
        %425 = vadd.xlane.f32.xlu0 %v308
        %v426 = vpop.xlane.xlu0 %425
        %427 = vadd.xlane.f32.xlu0 %v309
        %v428 = vpop.xlane.xlu0 %427
        %429 = vadd.xlane.f32.xlu0 %v310
        %v430 = vpop.xlane.xlu0 %429
        %431 = vadd.xlane.f32.xlu0 %v311
        %v432 = vpop.xlane.xlu0 %431
        %433 = vadd.xlane.f32.xlu0 %v312
        %v434 = vpop.xlane.xlu0 %433
        %435 = vadd.xlane.f32.xlu0 %v313
        %v436 = vpop.xlane.xlu0 %435
        %437 = vadd.xlane.f32.xlu0 %v314
        %v438 = vpop.xlane.xlu0 %437
        %439 = vadd.xlane.f32.xlu0 %v315
        %v440 = vpop.xlane.xlu0 %439
        %441 = vadd.xlane.f32.xlu0 %v316
        %v442 = vpop.xlane.xlu0 %441
        %443 = vadd.xlane.f32.xlu0 %v317
        %v444 = vpop.xlane.xlu0 %443
        %445 = vadd.xlane.f32.xlu0 %v318
        %v446 = vpop.xlane.xlu0 %445
        %v447 = vmax.f32 %v320, 1e-24
        %v448 = vmax.f32 %v322, 1e-24
        %v449 = vmax.f32 %v324, 1e-24
        %v450 = vmax.f32 %v326, 1e-24
        %v451 = vmax.f32 %v328, 1e-24
        %v452 = vmax.f32 %v330, 1e-24
        %v453 = vmax.f32 %v332, 1e-24
        %v454 = vmax.f32 %v334, 1e-24
        %v455 = vmax.f32 %v336, 1e-24
        %v456 = vmax.f32 %v338, 1e-24
        %v457 = vmax.f32 %v340, 1e-24
        %v458 = vmax.f32 %v342, 1e-24
        %v459 = vmax.f32 %v344, 1e-24
        %v460 = vmax.f32 %v346, 1e-24
        %v461 = vmax.f32 %v348, 1e-24
        %v462 = vmax.f32 %v350, 1e-24
        %v463 = vmax.f32 %v352, 1e-24
        %v464 = vmax.f32 %v354, 1e-24
        %v465 = vmax.f32 %v356, 1e-24
        %v466 = vmax.f32 %v358, 1e-24
        %v467 = vmax.f32 %v360, 1e-24
        %v468 = vmax.f32 %v362, 1e-24
        %v469 = vmax.f32 %v364, 1e-24
        %v470 = vmax.f32 %v366, 1e-24
        %v471 = vmax.f32 %v368, 1e-24
        %v472 = vmax.f32 %v370, 1e-24
        %v473 = vmax.f32 %v372, 1e-24
        %v474 = vmax.f32 %v374, 1e-24
        %v475 = vmax.f32 %v376, 1e-24
        %v476 = vmax.f32 %v378, 1e-24
        %v477 = vmax.f32 %v380, 1e-24
        %v478 = vmax.f32 %v382, 1e-24
        %v479 = vmax.f32 %v384, 1e-24
        %v480 = vmax.f32 %v386, 1e-24
        %v481 = vmax.f32 %v388, 1e-24
        %v482 = vmax.f32 %v390, 1e-24
        %v483 = vmax.f32 %v392, 1e-24
        %v484 = vmax.f32 %v394, 1e-24
        %v485 = vmax.f32 %v396, 1e-24
        %v486 = vmax.f32 %v398, 1e-24
        %v487 = vmax.f32 %v400, 1e-24
        %v488 = vmax.f32 %v402, 1e-24
        %v489 = vmax.f32 %v404, 1e-24
        %v490 = vmax.f32 %v406, 1e-24
        %v491 = vmax.f32 %v408, 1e-24
        %v492 = vmax.f32 %v410, 1e-24
        %v493 = vmax.f32 %v412, 1e-24
        %v494 = vmax.f32 %v414, 1e-24
        %v495 = vmax.f32 %v416, 1e-24
        %v496 = vmax.f32 %v418, 1e-24
        %v497 = vmax.f32 %v420, 1e-24
        %v498 = vmax.f32 %v422, 1e-24
        %v499 = vmax.f32 %v424, 1e-24
        %v500 = vmax.f32 %v426, 1e-24
        %v501 = vmax.f32 %v428, 1e-24
        %v502 = vmax.f32 %v430, 1e-24
        %v503 = vmax.f32 %v432, 1e-24
        %v504 = vmax.f32 %v434, 1e-24
        %v505 = vmax.f32 %v436, 1e-24
        %v506 = vmax.f32 %v438, 1e-24
        %v507 = vmax.f32 %v440, 1e-24
        %v508 = vmax.f32 %v442, 1e-24
        %v509 = vmax.f32 %v444, 1e-24
        %v510 = vmax.f32 %v446, 1e-24
        %v511 = vrsqrt.pop %v447
        %v512 = vrsqrt.pop %v448
        %v513 = vrsqrt.pop %v449
        %v514 = vrsqrt.pop %v450
        %v515 = vrsqrt.pop %v451
        %v516 = vrsqrt.pop %v452
        %v517 = vrsqrt.pop %v453
        %v518 = vrsqrt.pop %v454
        %v519 = vrsqrt.pop %v455
        %v520 = vrsqrt.pop %v456
        %v521 = vrsqrt.pop %v457
        %v522 = vrsqrt.pop %v458
        %v523 = vrsqrt.pop %v459
        %v524 = vrsqrt.pop %v460
        %v525 = vrsqrt.pop %v461
        %v526 = vrsqrt.pop %v462
        %v527 = vrsqrt.pop %v463
        %v528 = vrsqrt.pop %v464
        %v529 = vrsqrt.pop %v465
        %v530 = vrsqrt.pop %v466
        %v531 = vrsqrt.pop %v467
        %v532 = vrsqrt.pop %v468
        %v533 = vrsqrt.pop %v469
        %v534 = vrsqrt.pop %v470
        %v535 = vrsqrt.pop %v471
        %v536 = vrsqrt.pop %v472
        %v537 = vrsqrt.pop %v473
        %v538 = vrsqrt.pop %v474
        %v539 = vrsqrt.pop %v475
        %v540 = vrsqrt.pop %v476
        %v541 = vrsqrt.pop %v477
        %v542 = vrsqrt.pop %v478
        %v543 = vrsqrt.pop %v479
        %v544 = vrsqrt.pop %v480
        %v545 = vrsqrt.pop %v481
        %v546 = vrsqrt.pop %v482
        %v547 = vrsqrt.pop %v483
        %v548 = vrsqrt.pop %v484
        %v549 = vrsqrt.pop %v485
        %v550 = vrsqrt.pop %v486
        %v551 = vrsqrt.pop %v487
        %v552 = vrsqrt.pop %v488
        %v553 = vrsqrt.pop %v489
        %v554 = vrsqrt.pop %v490
        %v555 = vrsqrt.pop %v491
        %v556 = vrsqrt.pop %v492
        %v557 = vrsqrt.pop %v493
        %v558 = vrsqrt.pop %v494
        %v559 = vrsqrt.pop %v495
        %v560 = vrsqrt.pop %v496
        %v561 = vrsqrt.pop %v497
        %v562 = vrsqrt.pop %v498
        %v563 = vrsqrt.pop %v499
        %v564 = vrsqrt.pop %v500
        %v565 = vrsqrt.pop %v501
        %v566 = vrsqrt.pop %v502
        %v567 = vrsqrt.pop %v503
        %v568 = vrsqrt.pop %v504
        %v569 = vrsqrt.pop %v505
        %v570 = vrsqrt.pop %v506
        %v571 = vrsqrt.pop %v507
        %v572 = vrsqrt.pop %v508
        %v573 = vrsqrt.pop %v509
        %v574 = vrsqrt.pop %v510
        %v575 = vmul.f32 %v191, %v511
        %v576 = vmul.f32 %v192, %v512
        %v577 = vmul.f32 %v193, %v513
        %v578 = vmul.f32 %v194, %v514
        %v579 = vmul.f32 %v195, %v515
        %v580 = vmul.f32 %v196, %v516
        %v581 = vmul.f32 %v197, %v517
        %v582 = vmul.f32 %v198, %v518
        %v583 = vmul.f32 %v199, %v519
        %v584 = vmul.f32 %v200, %v520
        %v585 = vmul.f32 %v201, %v521
        %v586 = vmul.f32 %v202, %v522
        %v587 = vmul.f32 %v203, %v523
        %v588 = vmul.f32 %v204, %v524
        %v589 = vmul.f32 %v205, %v525
        %v590 = vmul.f32 %v206, %v526
        %v591 = vmul.f32 %v207, %v527
        %v592 = vmul.f32 %v208, %v528
        %v593 = vmul.f32 %v209, %v529
        %v594 = vmul.f32 %v210, %v530
        %v595 = vmul.f32 %v211, %v531
        %v596 = vmul.f32 %v212, %v532
        %v597 = vmul.f32 %v213, %v533
        %v598 = vmul.f32 %v214, %v534
        %v599 = vmul.f32 %v215, %v535
        %v600 = vmul.f32 %v216, %v536
        %v601 = vmul.f32 %v217, %v537
        %v602 = vmul.f32 %v218, %v538
        %v603 = vmul.f32 %v219, %v539
        %v604 = vmul.f32 %v220, %v540
        %v605 = vmul.f32 %v221, %v541
        %v606 = vmul.f32 %v222, %v542
        %v607 = vmul.f32 %v223, %v543
        %v608 = vmul.f32 %v224, %v544
        %v609 = vmul.f32 %v225, %v545
        %v610 = vmul.f32 %v226, %v546
        %v611 = vmul.f32 %v227, %v547
        %v612 = vmul.f32 %v228, %v548
        %v613 = vmul.f32 %v229, %v549
        %v614 = vmul.f32 %v230, %v550
        %v615 = vmul.f32 %v231, %v551
        %v616 = vmul.f32 %v232, %v552
        %v617 = vmul.f32 %v233, %v553
        %v618 = vmul.f32 %v234, %v554
        %v619 = vmul.f32 %v235, %v555
        %v620 = vmul.f32 %v236, %v556
        %v621 = vmul.f32 %v237, %v557
        %v622 = vmul.f32 %v238, %v558
        %v623 = vmul.f32 %v239, %v559
        %v624 = vmul.f32 %v240, %v560
        %v625 = vmul.f32 %v241, %v561
        %v626 = vmul.f32 %v242, %v562
        %v627 = vmul.f32 %v243, %v563
        %v628 = vmul.f32 %v244, %v564
        %v629 = vmul.f32 %v245, %v565
        %v630 = vmul.f32 %v246, %v566
        %v631 = vmul.f32 %v247, %v567
        %v632 = vmul.f32 %v248, %v568
        %v633 = vmul.f32 %v249, %v569
        %v634 = vmul.f32 %v250, %v570
        %v635 = vmul.f32 %v251, %v571
        %v636 = vmul.f32 %v252, %v572
        %v637 = vmul.f32 %v253, %v573
        %v638 = vmul.f32 %v254, %v574
        %v639 = vld [vmem:[%s1] sm:$0xff]
        %640 = vmatprep.subr.mxu0 0.0
        %641 = vmatpush1.xpose.msra.mxu0 %v590
        %642 = vmatprep.subr.mxu0 0.0
        %643 = vmatpush1.xpose.msra.mxu0 %v589
        %644 = vmatprep.subr.mxu0 0.0
        %645 = vmatpush1.xpose.msra.mxu0 %v588
        %646 = vmatprep.subr.mxu0 0.0
        %647 = vmatpush1.xpose.msra.mxu0 %v587
        %648 = vmatprep.subr.mxu0 0.0
        %649 = vmatpush1.xpose.msra.mxu0 %v586
        %650 = vmatprep.subr.mxu0 0.0
        %651 = vmatpush1.xpose.msra.mxu0 %v585
        %652 = vmatprep.subr.mxu0 0.0
        %653 = vmatpush1.xpose.msra.mxu0 %v584
        %654 = vmatprep.subr.mxu0 0.0
        %655 = vmatpush1.xpose.msra.mxu0 %v583
        %656 = vmatprep.subr.mxu0 0.0
        %657 = vmatpush1.xpose.msra.mxu0 %v582
        %658 = vmatprep.subr.mxu0 0.0
        %659 = vmatpush1.xpose.msra.mxu0 %v581
        %660 = vmatprep.subr.mxu0 0.0
        %661 = vmatpush1.xpose.msra.mxu0 %v580
        %662 = vmatprep.subr.mxu0 0.0
        %663 = vmatpush1.xpose.msra.mxu0 %v579
        %664 = vmatprep.subr.mxu0 0.0
        %665 = vmatpush1.xpose.msra.mxu0 %v578
        %666 = vmatprep.subr.mxu0 0.0
        %667 = vmatpush1.xpose.msra.mxu0 %v577
        %668 = vmatprep.subr.mxu0 0.0
        %669 = vmatpush1.xpose.msra.mxu0 %v576
        %670 = vmatprep.subr.mxu0 0.0
        %671 = vmatpush1.xpose.msra.mxu0 %v575
        %672 = vmatprep.subr.mxu0 0.0
        %673 = vmatpush2.xpose.msra.mxu0 %v606
        %674 = vmatprep.subr.mxu0 0.0
        %675 = vmatpush2.xpose.msra.mxu0 %v605
        %676 = vmatprep.subr.mxu0 0.0
        %677 = vmatpush2.xpose.msra.mxu0 %v604
        %678 = vmatprep.subr.mxu0 0.0
        %679 = vmatpush2.xpose.msra.mxu0 %v603
        %680 = vmatprep.subr.mxu0 0.0
        %681 = vmatpush2.xpose.msra.mxu0 %v602
        %682 = vmatprep.subr.mxu0 0.0
        %683 = vmatpush2.xpose.msra.mxu0 %v601
        %684 = vmatprep.subr.mxu0 0.0
        %685 = vmatpush2.xpose.msra.mxu0 %v600
        %686 = vmatprep.subr.mxu0 0.0
        %687 = vmatpush2.xpose.msra.mxu0 %v599
        %688 = vmatprep.subr.mxu0 0.0
        %689 = vmatpush2.xpose.msra.mxu0 %v598
        %690 = vmatprep.subr.mxu0 0.0
        %691 = vmatpush2.xpose.msra.mxu0 %v597
        %692 = vmatprep.subr.mxu0 0.0
        %693 = vmatpush2.xpose.msra.mxu0 %v596
        %694 = vmatprep.subr.mxu0 0.0
        %695 = vmatpush2.xpose.msra.mxu0 %v595
        %696 = vmatprep.subr.mxu0 0.0
        %697 = vmatpush2.xpose.msra.mxu0 %v594
        %698 = vmatprep.subr.mxu0 0.0
        %699 = vmatpush2.xpose.msra.mxu0 %v593
        %700 = vmatprep.subr.mxu0 0.0
        %701 = vmatpush2.xpose.msra.mxu0 %v592
        %702 = vmatprep.subr.mxu0 0.0
        %703 = vmatpush2.xpose.msra.mxu0 %v591
        %704 = vmatprep.mubr.f32.mxu0 0.0
        %705 = vmatmul.mubr.f32.gmra.mxu0 %v639
        %v706 = vpop.f32.mrf.mxu0
        %v707 = vadd.f32 0.0, %v706
        %v708 = vpop.f32.mrf.mxu0
        %v709 = vadd.f32 0.0, %v708
        %710 = vdwg.mxu0
        %711 = vmatprep.subr.mxu0 0.0
        %712 = vmatpush1.xpose.msra.mxu0 %v622
        %713 = vmatprep.subr.mxu0 0.0
        %714 = vmatpush1.xpose.msra.mxu0 %v621
        %715 = vmatprep.subr.mxu0 0.0
        %716 = vmatpush1.xpose.msra.mxu0 %v620
        %717 = vmatprep.subr.mxu0 0.0
        %718 = vmatpush1.xpose.msra.mxu0 %v619
        %719 = vmatprep.subr.mxu0 0.0
        %720 = vmatpush1.xpose.msra.mxu0 %v618
        %721 = vmatprep.subr.mxu0 0.0
        %722 = vmatpush1.xpose.msra.mxu0 %v617
        %723 = vmatprep.subr.mxu0 0.0
        %724 = vmatpush1.xpose.msra.mxu0 %v616
        %725 = vmatprep.subr.mxu0 0.0
        %726 = vmatpush1.xpose.msra.mxu0 %v615
        %727 = vmatprep.subr.mxu0 0.0
        %728 = vmatpush1.xpose.msra.mxu0 %v614
        %729 = vmatprep.subr.mxu0 0.0
        %730 = vmatpush1.xpose.msra.mxu0 %v613
        %731 = vmatprep.subr.mxu0 0.0
        %732 = vmatpush1.xpose.msra.mxu0 %v612
        %733 = vmatprep.subr.mxu0 0.0
        %734 = vmatpush1.xpose.msra.mxu0 %v611
        %735 = vmatprep.subr.mxu0 0.0
        %736 = vmatpush1.xpose.msra.mxu0 %v610
        %737 = vmatprep.subr.mxu0 0.0
        %738 = vmatpush1.xpose.msra.mxu0 %v609
        %739 = vmatprep.subr.mxu0 0.0
        %740 = vmatpush1.xpose.msra.mxu0 %v608
        %741 = vmatprep.subr.mxu0 0.0
        %742 = vmatpush1.xpose.msra.mxu0 %v607
        %743 = vmatprep.subr.mxu0 0.0
        %744 = vmatpush2.xpose.msra.mxu0 %v638
        %745 = vmatprep.subr.mxu0 0.0
        %746 = vmatpush2.xpose.msra.mxu0 %v637
        %747 = vmatprep.subr.mxu0 0.0
        %748 = vmatpush2.xpose.msra.mxu0 %v636
        %749 = vmatprep.subr.mxu0 0.0
        %750 = vmatpush2.xpose.msra.mxu0 %v635
        %751 = vmatprep.subr.mxu0 0.0
        %752 = vmatpush2.xpose.msra.mxu0 %v634
        %753 = vmatprep.subr.mxu0 0.0
        %754 = vmatpush2.xpose.msra.mxu0 %v633
        %755 = vmatprep.subr.mxu0 0.0
        %756 = vmatpush2.xpose.msra.mxu0 %v632
        %757 = vmatprep.subr.mxu0 0.0
        %758 = vmatpush2.xpose.msra.mxu0 %v631
        %759 = vmatprep.subr.mxu0 0.0
        %760 = vmatpush2.xpose.msra.mxu0 %v630
        %761 = vmatprep.subr.mxu0 0.0
        %762 = vmatpush2.xpose.msra.mxu0 %v629
        %763 = vmatprep.subr.mxu0 0.0
        %764 = vmatpush2.xpose.msra.mxu0 %v628
        %765 = vmatprep.subr.mxu0 0.0
        %766 = vmatpush2.xpose.msra.mxu0 %v627
        %767 = vmatprep.subr.mxu0 0.0
        %768 = vmatpush2.xpose.msra.mxu0 %v626
        %769 = vmatprep.subr.mxu0 0.0
        %770 = vmatpush2.xpose.msra.mxu0 %v625
        %771 = vmatprep.subr.mxu0 0.0
        %772 = vmatpush2.xpose.msra.mxu0 %v624
        %773 = vmatprep.subr.mxu0 0.0
        %774 = vmatpush2.xpose.msra.mxu0 %v623
        %775 = vmatprep.mubr.f32.mxu0 0.0
        %776 = vmatmul.mubr.f32.gmra.mxu0 %v639
        %v777 = vpop.f32.mrf.mxu0
        %v778 = vadd.f32 0.0, %v777
        %v779 = vpop.f32.mrf.mxu0
        %v780 = vadd.f32 0.0, %v779
        %781 = vdwg.mxu0
        %v782 = vmul.f32 %v707, %v707
        %v783 = vmul.f32 %v709, %v709
        %v784 = vmul.f32 %v778, %v778
        %v785 = vmul.f32 %v780, %v780
        %v786 = vsub.f32 1.0, %v782
        %v787 = vsub.f32 1.0, %v783
        %v788 = vsub.f32 1.0, %v784
        %v789 = vsub.f32 1.0, %v785
        %v790 = vmax.f32 %v786, 0.0
        %v791 = vmax.f32 %v787, 0.0
        %v792 = vmax.f32 %v788, 0.0
        %v793 = vmax.f32 %v789, 0.0
        %v794 = vrsqrt.pop %v790
        %v795 = vmul.f32 %v790, %v794
        %vm796 = vcmp.eq.f32.partialorder %v790, inf
        %v797 = vsel %vm796, %v790, %v795
        %vm798 = vcmp.eq.f32.partialorder %v790, 0.0
        %v799 = vand.u32 %v790, 2147483648
        %v800 = vsel %vm798, %v799, %v797
        %v801 = vrsqrt.pop %v791
        %v802 = vmul.f32 %v791, %v801
        %vm803 = vcmp.eq.f32.partialorder %v791, inf
        %v804 = vsel %vm803, %v791, %v802
        %vm805 = vcmp.eq.f32.partialorder %v791, 0.0
        %v806 = vand.u32 %v791, 2147483648
        %v807 = vsel %vm805, %v806, %v804
        %v808 = vrsqrt.pop %v792
        %v809 = vmul.f32 %v792, %v808
        %vm810 = vcmp.eq.f32.partialorder %v792, inf
        %v811 = vsel %vm810, %v792, %v809
        %vm812 = vcmp.eq.f32.partialorder %v792, 0.0
        %v813 = vand.u32 %v792, 2147483648
        %v814 = vsel %vm812, %v813, %v811
        %v815 = vrsqrt.pop %v793
        %v816 = vmul.f32 %v793, %v815
        %vm817 = vcmp.eq.f32.partialorder %v793, inf
        %v818 = vsel %vm817, %v793, %v816
        %vm819 = vcmp.eq.f32.partialorder %v793, 0.0
        %v820 = vand.u32 %v793, 2147483648
        %v821 = vsel %vm819, %v820, %v818
        %v822 = vmul.f32 %v707, 0.87758255
        %v823 = vmul.f32 %v709, 0.87758255
        %v824 = vmul.f32 %v778, 0.87758255
        %v825 = vmul.f32 %v780, 0.87758255
        %v826 = vmul.f32 %v800, 0.47942555
        %v827 = vmul.f32 %v807, 0.47942555
        %v828 = vmul.f32 %v814, 0.47942555
        %v829 = vmul.f32 %v821, 0.47942555
        %v830 = vsub.f32 %v822, %v826
        %v831 = vsub.f32 %v823, %v827
        %v832 = vsub.f32 %v824, %v828
        %v833 = vsub.f32 %v825, %v829
        %v834 = vsub.f32 %v707, -0.87758255
        %v835 = vsub.f32 %v709, -0.87758255
        %v836 = vsub.f32 %v778, -0.87758255
        %v837 = vsub.f32 %v780, -0.87758255
        %vm838 = vcmp.gt.f32.partialorder %v834, 0.0
        %vm839 = vcmp.gt.f32.partialorder %v835, 0.0
        %vm840 = vcmp.gt.f32.partialorder %v836, 0.0
        %vm841 = vcmp.gt.f32.partialorder %v837, 0.0
        %v842 = vsub.f32 %v707, 0.23971277
        %v843 = vsub.f32 %v709, 0.23971277
        %v844 = vsub.f32 %v778, 0.23971277
        %v845 = vsub.f32 %v780, 0.23971277
        %v846 = vsel %vm838, %v830, %v842
        %v847 = vsel %vm839, %v831, %v843
        %v848 = vsel %vm840, %v832, %v844
        %v849 = vsel %vm841, %v833, %v845
        %s850 = smul.u32 %s20, 512
        %v851 = vlaneseq
        %v852 = vand.u32 %v851, 127
        %v853 = vadd.s32 %v852, 128
        %v854 = vadd.s32 %v852, 256
        %v855 = vadd.s32 %v852, 384
        %v856 = vstv %s850
        %v857 = vadd.s32 %v856, %v852
        %v858 = vadd.s32 %v856, %v853
        %v859 = vadd.s32 %v856, %v854
        %v860 = vadd.s32 %v856, %v855
        %v861 = vld [vmem:[%s0] sm:$0xff]
        %862 = vset.pattern.permute.xlu0 0
        %863 = vperm.xlu0 %862, %v861
        %v864 = vpop.permute.xlu0 %863
        %vm865 = vcmp.eq.s32.totalorder %v857, %v864
        %vm866 = vcmp.eq.s32.totalorder %v858, %v864
        %vm867 = vcmp.eq.s32.totalorder %v859, %v864
        %vm868 = vcmp.eq.s32.totalorder %v860, %v864
        %v869 = vsel %vm865, %v846, %v707
        %v870 = vsel %vm866, %v847, %v709
        %v871 = vsel %vm867, %v848, %v778
        %v872 = vsel %vm868, %v849, %v780
        %v873 = vmul.f32 %v869, 32.0
        %v874 = vmul.f32 %v870, 32.0
        %v875 = vmul.f32 %v871, 32.0
        %v876 = vmul.f32 %v872, 32.0
        %877 = vst [vmem:[%s188] sm:$0xff] %v873
        %878 = vst [vmem:[%s188 + $0x8] sm:$0xff] %v874
        %879 = vst [vmem:[%s188 + $0x10] sm:$0xff] %v875
        %880 = vst [vmem:[%s188 + $0x18] sm:$0xff] %v876
        %s881 = sand.u32 %s96, 1
        %s882 = scalar_lea.sflag [#allocation4], %s881
        %s883 = sand.u32 %s96, 1
        %s884 = smul.addr %s883, 32
        %s885 = scalar_lea.vmem [#allocation5], %s884
        // Predicated region
        $region37: #{tpu_custom_call.1} parent=31 // pred_check
          %p886 = pneg %p106
        $region38: #{tpu_custom_call.1} parent=31 // pred_check_branch
          %888 = sbr.rel (%p886) target = $region40
        $region39: #{tpu_custom_call.1} parent=31 // pred_region
          %s889 = smul.u32 4, %s20
          %s891 = ssub.s32 512, 512
          %892 = vsyncadd %s882, %s891
          %s893 = smul.addr %s889, 128
          %s894 = scalar_lea.hbm %s3, %s893
          %s896 = sshll.u32 %s885, 4
          %s897 = int_to_ptr.vmem [resolvable:$true] %s896
          %899 = dma.vmem_to_hbm [thread:$0]  %s897, 512, %s894, %s882
        $region40: #{tpu_custom_call.1} parent=31 // pred_fallthru
          _
      $region32: #{tpu_custom_call.1} parent=5 // pred_fallthru
        _
      %p900 = scmp.le.s32.totalorder 2, %s15
      // Predicated region
      $region41: #{tpu_custom_call.1} parent=5 // pred_check
        %p901 = pneg %p900
      $region42: #{tpu_custom_call.1} parent=5 // pred_check_branch
        %903 = sbr.rel (%p901) target = $region44
      $region43: #{tpu_custom_call.1} parent=5 // pred_region
        %s904 = ssub.s32 %s15, 2
        // Predicated region
        $region45: #{tpu_custom_call.1} parent=43 // pred_check
          %p905 = pneg %p112
        $region46: #{tpu_custom_call.1} parent=43 // pred_check_branch
          %907 = sbr.rel (%p905) target = $region48
        $region47: #{tpu_custom_call.1} parent=43 // pred_region
          %s908 = sand.u32 %s97, 1
          %s909 = scalar_lea.sflag [#allocation4], %s908
          %s910 = sand.u32 %s97, 1
          %s911 = smul.addr %s910, 32
          %s912 = scalar_lea.vmem [#allocation5], %s911
          %913 = dma.done %s909, 512
        $region48: #{tpu_custom_call.1} parent=43 // pred_fallthru
          _
      $region44: #{tpu_custom_call.1} parent=5 // pred_fallthru
        _
    $region6: #{tpu_custom_call.1} parent=1 // loop_footer
      %s19 = sadd.s32 1, %s15
    $region7: #{tpu_custom_call.1} parent=1 // loop_footer_branch
      %14 = sbr.rel target = $region3
    $region8: #{tpu_custom_call.1} parent=1 // loop_exit
      _
    %914 = vsyncpa [#allocation3], 1
    %s915 = scalar_lea.sflag [#allocation3], 1
    %916 = vsyncpa %s915, 1
    %917 = vsyncpa [#allocation4], 1
    %s918 = scalar_lea.sflag [#allocation4], 1
    %919 = vsyncpa %s918, 1

</llo_original>
